<compile_context>
chip_gen: v7x
topology: tpu7x:2x2x1
jax: 0.10.0
libtpu: 0.0.40
codegen_flags: <defaults>
</compile_context>

<pallas_src>
import jax
import jax.numpy as jnp
from jax.experimental import pallas as pl
from jax.experimental.pallas import tpu as pltpu

_LANE = 128


def _pos_add_kernel(x_ref, pos_ref, o_ref):
    # Pure streaming elementwise add (2 HBM reads + 1 write); VPU work is
    # negligible, the whole kernel is HBM-bandwidth-bound.
    o_ref[...] = (x_ref[...] + pos_ref[...]).astype(o_ref.dtype)


def _vmem_capacity_bytes():
    """Per-generation physical VMEM (128 MiB v5e/v6e, 64 MiB per-TC v7x)."""
    try:
        return int(pltpu.get_tpu_info().vmem_capacity_bytes)
    except Exception:
        return 64 * 1024 * 1024  # conservative fallback (v7x per-TC size)


def _sublane_rows(itemsize):
    # Packed sublane granularity: 8 rows (4-byte), 16 (2-byte), 32 (1-byte).
    return max(8, 32 // int(itemsize))


def _choose_tile_rows(rows, table_rows, width, itemsize, budget_bytes, sublane):
    """Largest row tile that divides `rows`, keeps the 3-operand x 2-buffer
    working set under `budget_bytes`, is sublane-aligned, and leaves >= 2 grid
    steps when the shape permits (so both v7x TensorCores get work)."""
    bytes_per_row = width * itemsize
    max_by_vmem = budget_bytes // (6 * bytes_per_row)
    cap = min(rows, max_by_vmem)
    if rows >= 2 * sublane:
        cap = min(cap, rows // 2)        # keep >= 2 grid steps (megacore)
    cap -= cap % sublane                 # sublane-aligned candidates only
    for t in range(cap, 0, -sublane):
        if rows % t == 0:
            return t
    # Full-array block (block dim == array dim) is always legal, but only if
    # the table block can also use its full first dim.
    if rows == table_rows and 6 * rows * bytes_per_row <= budget_bytes:
        return rows
    return None  # no legal TPU tiling -> caller falls back to plain XLA add


def positional_embedding_forward(input_ids, pos_table, *, tile_rows=None,
                                 force_pallas=False, donate_input=False,
                                 min_pallas_bytes=4 << 20):
    """input_ids: (S, d_model) float features; pos_table: (seq_length, d_model).

    Returns (1, S, d_model), matching the PyTorch broadcast-add semantics.
    Requires S <= seq_length (same constraint as the nn.Embedding lookup).
    `tile_rows` (optional) is a row-tile of the lane-dense 2-D view and is
    validated / clamped against this chip generation's VMEM.
    """
    S, D = input_ids.shape
    seq_length, D_t = pos_table.shape
    assert D == D_t, "d_model mismatch between input and positional table"
    assert S <= seq_length, "sequence longer than the positional table"

    out_dtype = jnp.result_type(input_ids.dtype, pos_table.dtype)
    itemsize = jnp.dtype(out_dtype).itemsize
    total_bytes = S * D * itemsize

    def _xla_fallback():
        # A fused XLA elementwise add already runs at HBM roofline for small /
        # awkward shapes; pallas_call launch + per-step overhead would lose.
        out = input_ids.astype(out_dtype) + pos_table[:S, :].astype(out_dtype)
        return out[None, :, :]

    want_pallas = (force_pallas or tile_rows is not None
                   or total_bytes >= min_pallas_bytes)
    if not want_pallas:
        return _xla_fallback()

    # --- Present a lane-dense 2-D view (last dim a multiple of 128). --------
    if D % _LANE == 0:
        rows, t_rows, width = S, seq_length, D
        x2d, t2d = input_ids, pos_table
    elif (S * D) % _LANE == 0 and (seq_length * D) % _LANE == 0:
        # Contiguous row-major reshape: free for HBM arrays.  The first
        # S*D/128 reshaped rows of the table are exactly its first S original
        # rows, so the index_map still needs no wrapper-side slice.
        width = _LANE
        rows, t_rows = (S * D) // _LANE, (seq_length * D) // _LANE
        x2d = input_ids.reshape(rows, width)
        t2d = pos_table.reshape(t_rows, width)
    else:
        # No lane-dense folding exists -> masked vst.msk stores would waste
        # most of the store bandwidth; the fused XLA add wins here.
        return _xla_fallback()

    sublane = max(_sublane_rows(jnp.dtype(d).itemsize)
                  for d in (input_ids.dtype, pos_table.dtype, out_dtype))
    vmem_cap = _vmem_capacity_bytes()
    budget = vmem_cap // 2    # leave half of physical VMEM as headroom

    if tile_rows is not None:
        # Per-generation guard: reject (and re-derive) a manual tile that
        # would not fit this chip's VMEM or is misaligned, instead of letting
        # compilation fail (e.g. a v6e-sized tile on v7x's 64 MiB VMEM).
        ok = (rows % tile_rows == 0
              and (tile_rows % sublane == 0 or tile_rows == rows == t_rows)
              and 6 * tile_rows * width * itemsize <= budget)
        if not ok:
            tile_rows = None
    if tile_rows is None:
        tile_rows = _choose_tile_rows(rows, t_rows, width, itemsize,
                                      budget, sublane)
    if tile_rows is None:
        return _xla_fallback()

    working_set = 6 * tile_rows * width * itemsize
    vmem_limit = int(min(vmem_cap, max(16 << 20, working_set + (8 << 20))))

    grid = (rows // tile_rows,)
    block = pl.BlockSpec((tile_rows, width), lambda i: (i, 0))

    aliases = {}
    if donate_input and input_ids.dtype == out_dtype and D % _LANE == 0:
        # Reuse the input HBM buffer for the output (no extra S*D allocation).
        aliases = {0: 0}

    out2d = pl.pallas_call(
        _pos_add_kernel,
        out_shape=jax.ShapeDtypeStruct((rows, width), out_dtype),
        grid=grid,
        in_specs=[
            block,   # input features, lane-dense view, tiled along rows
            block,   # positional table: index_map reads exactly the first
                     # `rows` (reshaped) rows == positions [0, S), so the
                     # full table is passed with no extra HBM slice pass.
        ],
        out_specs=block,
        input_output_aliases=aliases,
        compiler_params=pltpu.CompilerParams(
            dimension_semantics=("parallel",),
            vmem_limit_bytes=vmem_limit),
    )(x2d, t2d)

    # PyTorch broadcast (S, D) + (1, S, D) -> (1, S, D)
    return out2d.reshape(S, D)[None, :, :]


if __name__ == "__main__":
    key = jax.random.PRNGKey(0)
    k1, k2, k3, k4, k5, k6 = jax.random.split(key, 6)

    # --- 1) Shape implied by the module (tiny): auto-dispatch uses the fused
    #        XLA add (Pallas overhead not worth it at KiB sizes). ------------
    S0, D0 = 8, 32
    x0 = jax.random.normal(k1, (S0, D0), dtype=jnp.float32)
    t0 = jax.random.normal(k2, (S0, D0), dtype=jnp.float32)
    out0 = jax.block_until_ready(positional_embedding_forward(x0, t0))
    ref0 = x0[None, :, :] + t0[None, :S0, :]
    assert out0.shape == (1, S0, D0)
    assert jnp.allclose(out0, ref0, atol=1e-6), "small-shape mismatch"

    # --- 2) Pallas path, d_model already lane-dense (multiple of 128);
    #        table longer than S exercises the no-pre-slice index_map. -------
    S1, D1, LEN1 = 256, 128, 512
    x1 = jax.random.normal(k3, (S1, D1), dtype=jnp.float32)
    t1 = jax.random.normal(k4, (LEN1, D1), dtype=jnp.float32)
    out1 = jax.block_until_ready(
        positional_embedding_forward(x1, t1, force_pallas=True))
    ref1 = x1[None, :, :] + t1[None, :S1, :]
    assert out1.shape == (1, S1, D1)
    assert jnp.allclose(out1, ref1, atol=1e-6), "pallas-path mismatch (D=128)"

    # --- 3) Pallas path with d_model < 128: lane-dense fold
    #        (S, 64) -> (S*64/128, 128) so stores are unmasked vst. ----------
    S2, D2, LEN2 = 256, 64, 384
    x2 = jax.random.normal(k5, (S2, D2), dtype=jnp.float32)
    t2 = jax.random.normal(k6, (LEN2, D2), dtype=jnp.float32)
    out2 = jax.block_until_ready(
        positional_embedding_forward(x2, t2, force_pallas=True))
    ref2 = x2[None, :, :] + t2[None, :S2, :]
    assert out2.shape == (1, S2, D2)
    assert jnp.allclose(out2, ref2, atol=1e-6), "lane-dense-fold mismatch"

    print("KERNEL_OK")
</pallas_src>

<mosaic_0001>
module attributes {stable_mosaic.version = 11 : i64} {
  func.func @_pos_add_kernel(%arg0: i32, %arg1: memref<128x128xf32, #tpu.memory_space<vmem>>, %arg2: memref<128x128xf32, #tpu.memory_space<vmem>>, %arg3: memref<128x128xf32, #tpu.memory_space<vmem>>) attributes {dimension_semantics = [#tpu.dimension_semantics<parallel>], iteration_bounds = array<i64: 2>, scalar_prefetch = 0 : i64, scratch_operands = 0 : i64, tpu.core_type = #tpu.core_type<tc>, window_params = [{transform_indices = @transform_0, window_bounds = array<i64: 128, 128>}, {transform_indices = @transform_1, window_bounds = array<i64: 128, 128>}, {transform_indices = @transform_2, window_bounds = array<i64: 128, 128>}]} {
    %c0 = arith.constant 0 : index
    %c0_0 = arith.constant 0 : index
    %0 = vector.load %arg1[%c0, %c0_0] : memref<128x128xf32, #tpu.memory_space<vmem>>, vector<128x128xf32>
    %c0_1 = arith.constant 0 : index
    %c0_2 = arith.constant 0 : index
    %1 = vector.load %arg2[%c0_1, %c0_2] : memref<128x128xf32, #tpu.memory_space<vmem>>, vector<128x128xf32>
    %2 = arith.addf %0, %1 : vector<128x128xf32>
    %c0_3 = arith.constant 0 : index
    %c0_4 = arith.constant 0 : index
    %3 = vector.load %arg3[%c0_3, %c0_4] : memref<128x128xf32, #tpu.memory_space<vmem>>, vector<128x128xf32>
    tpu.vector_store %arg3[%c0_3, %c0_4], %2 {strides = array<i32>} : memref<128x128xf32, #tpu.memory_space<vmem>>, vector<128x128xf32>,
    return
  }
  func.func @transform_0(%arg0: i32) -> (i32, i32) {
    %c0_i32 = arith.constant 0 : i32
    %c0_i32_0 = arith.constant 0 : i32
    return %arg0, %c0_i32 : i32, i32
  }
  func.func @transform_1(%arg0: i32) -> (i32, i32) {
    %c0_i32 = arith.constant 0 : i32
    %c0_i32_0 = arith.constant 0 : i32
    return %arg0, %c0_i32 : i32, i32
  }
  func.func @transform_2(%arg0: i32) -> (i32, i32) {
    %c0_i32 = arith.constant 0 : i32
    %c0_i32_0 = arith.constant 0 : i32
    return %arg0, %c0_i32 : i32, i32
  }
}

</mosaic_0001>

<llo_original>
// kernel: tpu_custom_call.1
$region0: #{tpu_custom_call.1}
  #allocation0 [shape = 'u32[]', space=smem, size = 0x4, offset = 0x4, fixed_abs, tag = 'smem constant byte address 0x4 - core index']
  #allocation1 [shape = 'u32[144,128]{1,0:T(1,128)}', space=vmem, size = 0x12000, scoped, tag = 'internal scratch']
  %s0 = inlined_call_operand.hbm [shape: f32[256,128], index: 0, kind: input, shape index: {}]
  %s1 = inlined_call_operand.hbm [shape: f32[512,128], index: 1, kind: input, shape index: {}]
  %s2 = inlined_call_operand.hbm [shape: f32[256,128], index: 2, kind: output, shape index: {}]
  %s3 = sld [smem:[#allocation0]]
  $region49: #{tpu_custom_call.1} parent=0
    _
  %s5 = ssub.s32 1, %s3
  %s6 = scalar_select 0, %s5, %s3
  $region1: #{tpu_custom_call.1} parent=0
    #allocation2 [shape = 'u8[131072]{0}', space=vmem, size = 0x20000, scoped, tag = 'input window, operand 0']
    #allocation3 [shape = 's32[2]{0}', space=sflag, size = 0x8, scoped, tag = 'scoped memory for tpu_custom_call.1']
    #allocation4 [shape = 's32[2]{0}', space=sflag, size = 0x8, scoped, tag = 'scoped memory for tpu_custom_call.1']
    #allocation5 [shape = 'u8[131072]{0}', space=vmem, size = 0x20000, scoped, tag = 'input window, operand 1']
    #allocation6 [shape = 's32[2]{0}', space=sflag, size = 0x8, scoped, tag = 'scoped memory for tpu_custom_call.1']
    #allocation7 [shape = 'u8[131072]{0}', space=vmem, size = 0x20000, scoped, tag = 'output window, operand 0']
    %7 = vsyncpa [#allocation3], 0
    %s8 = scalar_lea.sflag [#allocation3], 1
    %9 = vsyncpa %s8, 0
    %10 = vsyncpa [#allocation6], 0
    %s11 = scalar_lea.sflag [#allocation6], 1
    %12 = vsyncpa %s11, 0
    %13 = vsyncpa [#allocation4], 0
    %s14 = scalar_lea.sflag [#allocation4], 1
    %15 = vsyncpa %s14, 0
    loop: start=0, step=1, limit=4
    $region2: #{tpu_custom_call.1} parent=1 // loop_pre_header
      _
    $region3: #{tpu_custom_call.1} parent=1 // loop_header
      %s17 = sphi 0, %s21
      %p18 = scmp.ge.s32.totalorder %s17, 4
      %s27 = sphi 0, %s29
      %s30 = sphi 0, %s27
      %s31 = sphi 0, %s30
      %s47 = sphi 0, %s31
      %s53 = sphi 0, %s55
      %s56 = sphi 0, %s53
      %s57 = sphi 0, %s56
      %s73 = sphi 0, %s57
      %s79 = sphi 0, %s81
      %s82 = sphi 0, %s79
      %s83 = sphi 0, %s82
      %s99 = sphi 0, %s83
    $region4: #{tpu_custom_call.1} parent=1 // loop_header_branch
      %20 = sbr.rel (%p18) target = $region8
    $region5: #{tpu_custom_call.1} parent=1 // loop_body
      %s22 = ssub.s32 %s17, 1
      %s23 = ssub.s32 %s17, 2
      %s24 = sadd.s32 %s17, 1
      %s25 = ssub.s32 %s17, %s24
      %p26 = scmp.eq.s32.totalorder %s25, 0
      %s28 = sadd.s32 %s27, 1
      %s29 = scalar_select %p26, %s27, %s28
      %p32 = pneg %p26
      %p33 = scmp.eq.s32.totalorder %s17, 1
      %p34 = por %p32, %p33
      %p35 = scmp.ne.s32.totalorder %s27, %s30
      %p36 = scmp.eq.s32.totalorder %s17, 0
      %p37 = por %p35, %p36
      %p38 = scmp.ne.s32.totalorder %s27, %s30
      %p39 = scmp.eq.s32.totalorder %s22, 1
      %p40 = por %p38, %p39
      %p41 = scmp.ne.s32.totalorder %s30, %s31
      %p42 = scmp.eq.s32.totalorder %s22, 0
      %p43 = por %p41, %p42
      %p44 = scmp.ne.s32.totalorder %s30, %s31
      %p45 = scmp.eq.s32.totalorder %s23, 1
      %p46 = por %p44, %p45
      %p48 = scmp.ne.s32.totalorder %s31, %s47
      %p49 = scmp.eq.s32.totalorder %s23, 0
      %p50 = por %p48, %p49
      %s51 = ssub.s32 %s17, %s24
      %p52 = scmp.eq.s32.totalorder %s51, 0
      %s54 = sadd.s32 %s53, 1
      %s55 = scalar_select %p52, %s53, %s54
      %p58 = pneg %p52
      %p59 = scmp.eq.s32.totalorder %s17, 1
      %p60 = por %p58, %p59
      %p61 = scmp.ne.s32.totalorder %s53, %s56
      %p62 = scmp.eq.s32.totalorder %s17, 0
      %p63 = por %p61, %p62
      %p64 = scmp.ne.s32.totalorder %s53, %s56
      %p65 = scmp.eq.s32.totalorder %s22, 1
      %p66 = por %p64, %p65
      %p67 = scmp.ne.s32.totalorder %s56, %s57
      %p68 = scmp.eq.s32.totalorder %s22, 0
      %p69 = por %p67, %p68
      %p70 = scmp.ne.s32.totalorder %s56, %s57
      %p71 = scmp.eq.s32.totalorder %s23, 1
      %p72 = por %p70, %p71
      %p74 = scmp.ne.s32.totalorder %s57, %s73
      %p75 = scmp.eq.s32.totalorder %s23, 0
      %p76 = por %p74, %p75
      %s77 = ssub.s32 %s17, %s24
      %p78 = scmp.eq.s32.totalorder %s77, 0
      %s80 = sadd.s32 %s79, 1
      %s81 = scalar_select %p78, %s79, %s80
      %p84 = pneg %p78
      %p85 = scmp.eq.s32.totalorder %s17, 1
      %p86 = por %p84, %p85
      %p87 = scmp.ne.s32.totalorder %s79, %s82
      %p88 = scmp.eq.s32.totalorder %s17, 0
      %p89 = por %p87, %p88
      %p90 = scmp.ne.s32.totalorder %s79, %s82
      %p91 = scmp.eq.s32.totalorder %s22, 1
      %p92 = por %p90, %p91
      %p93 = scmp.ne.s32.totalorder %s82, %s83
      %p94 = scmp.eq.s32.totalorder %s22, 0
      %p95 = por %p93, %p94
      %p96 = scmp.ne.s32.totalorder %s82, %s83
      %p97 = scmp.eq.s32.totalorder %s23, 1
      %p98 = por %p96, %p97
      %p100 = scmp.ne.s32.totalorder %s83, %s99
      %p101 = scmp.eq.s32.totalorder %s23, 0
      %p102 = por %p100, %p101
      %p103 = scmp.le.s32.totalorder 1, %s17
      %p104 = scmp.lt.s32.totalorder %s17, 3
      %p105 = pnand %p103, %p104
      %p106 = pneg %p105
      // Predicated region
      $region9: #{tpu_custom_call.1} parent=5 // pred_check
        _
      $region10: #{tpu_custom_call.1} parent=5 // pred_check_branch
        %108 = sbr.rel (%p105) target = $region12
      $region11: #{tpu_custom_call.1} parent=5 // pred_region
        %s109 = ssub.s32 %s17, 1
      $region12: #{tpu_custom_call.1} parent=5 // pred_fallthru
        _
      %p110 = scmp.lt.s32.totalorder %s17, 2
      // Predicated region
      $region13: #{tpu_custom_call.1} parent=5 // pred_check
        %p111 = pneg %p110
      $region14: #{tpu_custom_call.1} parent=5 // pred_check_branch
        %113 = sbr.rel (%p111) target = $region16
      $region15: #{tpu_custom_call.1} parent=5 // pred_region
        // Predicated region
        $region17: #{tpu_custom_call.1} parent=15 // pred_check
          %p114 = pneg %p37
        $region18: #{tpu_custom_call.1} parent=15 // pred_check_branch
          %116 = sbr.rel (%p114) target = $region20
        $region19: #{tpu_custom_call.1} parent=15 // pred_region
          %s117 = sand.u32 %s27, 1
          %s118 = scalar_lea.sflag [#allocation3], %s117
          %s119 = sand.u32 %s27, 1
          %s120 = smul.addr %s119, 128
          %s121 = scalar_lea.vmem [#allocation2], %s120
          %s122 = smul.u32 16, %s17
          %s124 = ssub.s32 2048, 2048
          %125 = vsyncadd %s118, %s124
          %s126 = smul.addr %s122, 128
          %s127 = scalar_lea.hbm %s0, %s126
          %s128 = sshll.u32 %s121, 4
          %s129 = int_to_ptr.vmem [resolvable:$true] %s128
          %134 = dma.hbm_to_vmem [thread:$0]  %s127, 2048, %s129, %s118, 128, 128, 8
        $region20: #{tpu_custom_call.1} parent=15 // pred_fallthru
          _
        // Predicated region
        $region21: #{tpu_custom_call.1} parent=15 // pred_check
          %p135 = pneg %p63
        $region22: #{tpu_custom_call.1} parent=15 // pred_check_branch
          %137 = sbr.rel (%p135) target = $region24
        $region23: #{tpu_custom_call.1} parent=15 // pred_region
          %s138 = sand.u32 %s53, 1
          %s139 = scalar_lea.sflag [#allocation6], %s138
          %s140 = sand.u32 %s53, 1
          %s141 = smul.addr %s140, 128
          %s142 = scalar_lea.vmem [#allocation5], %s141
          %s143 = smul.u32 16, %s17
          %s145 = ssub.s32 2048, 2048
          %146 = vsyncadd %s139, %s145
          %s147 = smul.addr %s143, 128
          %s148 = scalar_lea.hbm %s1, %s147
          %s149 = sshll.u32 %s142, 4
          %s150 = int_to_ptr.vmem [resolvable:$true] %s149
          %155 = dma.hbm_to_vmem [thread:$0]  %s148, 2048, %s150, %s139, 128, 128, 8
        $region24: #{tpu_custom_call.1} parent=15 // pred_fallthru
          _
      $region16: #{tpu_custom_call.1} parent=5 // pred_fallthru
        _
      %p156 = scmp.le.s32.totalorder 1, %s17
      %p157 = scmp.lt.s32.totalorder %s17, 3
      %p158 = pnand %p156, %p157
      %p159 = pneg %p158
      // Predicated region
      $region25: #{tpu_custom_call.1} parent=5 // pred_check
        _
      $region26: #{tpu_custom_call.1} parent=5 // pred_check_branch
        %161 = sbr.rel (%p158) target = $region28
      $region27: #{tpu_custom_call.1} parent=5 // pred_region
        %s162 = ssub.s32 %s17, 1
        %s163 = sand.u32 %s30, 1
        %s164 = scalar_lea.sflag [#allocation3], %s163
        %s165 = sand.u32 %s30, 1
        %s166 = smul.addr %s165, 128
        %s167 = scalar_lea.vmem [#allocation2], %s166
        // Predicated region
        $region29: #{tpu_custom_call.1} parent=27 // pred_check
          %p168 = pneg %p43
        $region30: #{tpu_custom_call.1} parent=27 // pred_check_branch
          %170 = sbr.rel (%p168) target = $region32
        $region31: #{tpu_custom_call.1} parent=27 // pred_region
          %171 = dma.done %s164, 2048
        $region32: #{tpu_custom_call.1} parent=27 // pred_fallthru
          _
        %s172 = sand.u32 %s56, 1
        %s173 = scalar_lea.sflag [#allocation6], %s172
        %s174 = sand.u32 %s56, 1
        %s175 = smul.addr %s174, 128
        %s176 = scalar_lea.vmem [#allocation5], %s175
        // Predicated region
        $region33: #{tpu_custom_call.1} parent=27 // pred_check
          %p177 = pneg %p69
        $region34: #{tpu_custom_call.1} parent=27 // pred_check_branch
          %179 = sbr.rel (%p177) target = $region36
        $region35: #{tpu_custom_call.1} parent=27 // pred_region
          %180 = dma.done %s173, 2048
        $region36: #{tpu_custom_call.1} parent=27 // pred_fallthru
          _
        %s181 = sand.u32 %s30, 1
        %s182 = scalar_lea.sflag [#allocation3], %s181
        %s183 = sand.u32 %s30, 1
        %s184 = smul.addr %s183, 128
        %s185 = scalar_lea.vmem [#allocation2], %s184
        %p186 = pneg %p43
        %p187 = pneg %p40
        %s188 = sand.u32 %s56, 1
        %s189 = scalar_lea.sflag [#allocation6], %s188
        %s190 = sand.u32 %s56, 1
        %s191 = smul.addr %s190, 128
        %s192 = scalar_lea.vmem [#allocation5], %s191
        %p193 = pneg %p69
        %p194 = pneg %p66
        %p195 = pneg %p95
        %p196 = pneg %p92
        %s197 = sand.u32 %s82, 1
        %s198 = scalar_lea.sflag [#allocation4], %s197
        %s199 = sand.u32 %s82, 1
        %s200 = smul.addr %s199, 128
        %s201 = scalar_lea.vmem [#allocation7], %s200
        %s202 = smul.u32 16, %s22
        %s203 = smul.u32 16, %s22
        %s204 = smul.u32 16, %s22
        %v205 = vld [vmem:[%s167] sm:$0xff]
        %v206 = vld [vmem:[%s167 + $0x8] sm:$0xff]
        %v207 = vld [vmem:[%s167 + $0x10] sm:$0xff]
        %v208 = vld [vmem:[%s167 + $0x18] sm:$0xff]
        %v209 = vld [vmem:[%s167 + $0x20] sm:$0xff]
        %v210 = vld [vmem:[%s167 + $0x28] sm:$0xff]
        %v211 = vld [vmem:[%s167 + $0x30] sm:$0xff]
        %v212 = vld [vmem:[%s167 + $0x38] sm:$0xff]
        %v213 = vld [vmem:[%s167 + $0x40] sm:$0xff]
        %v214 = vld [vmem:[%s167 + $0x48] sm:$0xff]
        %v215 = vld [vmem:[%s167 + $0x50] sm:$0xff]
        %v216 = vld [vmem:[%s167 + $0x58] sm:$0xff]
        %v217 = vld [vmem:[%s167 + $0x60] sm:$0xff]
        %v218 = vld [vmem:[%s167 + $0x68] sm:$0xff]
        %v219 = vld [vmem:[%s167 + $0x70] sm:$0xff]
        %v220 = vld [vmem:[%s167 + $0x78] sm:$0xff]
        %v221 = vld [vmem:[%s176] sm:$0xff]
        %v222 = vld [vmem:[%s176 + $0x8] sm:$0xff]
        %v223 = vld [vmem:[%s176 + $0x10] sm:$0xff]
        %v224 = vld [vmem:[%s176 + $0x18] sm:$0xff]
        %v225 = vld [vmem:[%s176 + $0x20] sm:$0xff]
        %v226 = vld [vmem:[%s176 + $0x28] sm:$0xff]
        %v227 = vld [vmem:[%s176 + $0x30] sm:$0xff]
        %v228 = vld [vmem:[%s176 + $0x38] sm:$0xff]
        %v229 = vld [vmem:[%s176 + $0x40] sm:$0xff]
        %v230 = vld [vmem:[%s176 + $0x48] sm:$0xff]
        %v231 = vld [vmem:[%s176 + $0x50] sm:$0xff]
        %v232 = vld [vmem:[%s176 + $0x58] sm:$0xff]
        %v233 = vld [vmem:[%s176 + $0x60] sm:$0xff]
        %v234 = vld [vmem:[%s176 + $0x68] sm:$0xff]
        %v235 = vld [vmem:[%s176 + $0x70] sm:$0xff]
        %v236 = vld [vmem:[%s176 + $0x78] sm:$0xff]
        %v237 = vadd.f32 %v205, %v221
        %v238 = vadd.f32 %v206, %v222
        %v239 = vadd.f32 %v207, %v223
        %v240 = vadd.f32 %v208, %v224
        %v241 = vadd.f32 %v209, %v225
        %v242 = vadd.f32 %v210, %v226
        %v243 = vadd.f32 %v211, %v227
        %v244 = vadd.f32 %v212, %v228
        %v245 = vadd.f32 %v213, %v229
        %v246 = vadd.f32 %v214, %v230
        %v247 = vadd.f32 %v215, %v231
        %v248 = vadd.f32 %v216, %v232
        %v249 = vadd.f32 %v217, %v233
        %v250 = vadd.f32 %v218, %v234
        %v251 = vadd.f32 %v219, %v235
        %v252 = vadd.f32 %v220, %v236
        %253 = vst [vmem:[%s201] sm:$0xff] %v237
        %254 = vst [vmem:[%s201 + $0x8] sm:$0xff] %v238
        %255 = vst [vmem:[%s201 + $0x10] sm:$0xff] %v239
        %256 = vst [vmem:[%s201 + $0x18] sm:$0xff] %v240
        %257 = vst [vmem:[%s201 + $0x20] sm:$0xff] %v241
        %258 = vst [vmem:[%s201 + $0x28] sm:$0xff] %v242
        %259 = vst [vmem:[%s201 + $0x30] sm:$0xff] %v243
        %260 = vst [vmem:[%s201 + $0x38] sm:$0xff] %v244
        %261 = vst [vmem:[%s201 + $0x40] sm:$0xff] %v245
        %262 = vst [vmem:[%s201 + $0x48] sm:$0xff] %v246
        %263 = vst [vmem:[%s201 + $0x50] sm:$0xff] %v247
        %264 = vst [vmem:[%s201 + $0x58] sm:$0xff] %v248
        %265 = vst [vmem:[%s201 + $0x60] sm:$0xff] %v249
        %266 = vst [vmem:[%s201 + $0x68] sm:$0xff] %v250
        %267 = vst [vmem:[%s201 + $0x70] sm:$0xff] %v251
        %268 = vst [vmem:[%s201 + $0x78] sm:$0xff] %v252
        %s269 = sand.u32 %s82, 1
        %s270 = scalar_lea.sflag [#allocation4], %s269
        %s271 = sand.u32 %s82, 1
        %s272 = smul.addr %s271, 128
        %s273 = scalar_lea.vmem [#allocation7], %s272
        // Predicated region
        $region37: #{tpu_custom_call.1} parent=27 // pred_check
          %p274 = pneg %p92
        $region38: #{tpu_custom_call.1} parent=27 // pred_check_branch
          %276 = sbr.rel (%p274) target = $region40
        $region39: #{tpu_custom_call.1} parent=27 // pred_region
          %s277 = smul.u32 16, %s22
          %s279 = ssub.s32 2048, 2048
          %280 = vsyncadd %s270, %s279
          %s281 = smul.addr %s277, 128
          %s282 = scalar_lea.hbm %s2, %s281
          %s283 = sshll.u32 %s273, 4
          %s284 = int_to_ptr.vmem [resolvable:$true] %s283
          %289 = dma.vmem_to_hbm [thread:$0]  %s284, 2048, %s282, %s270, 128, 128, 8
        $region40: #{tpu_custom_call.1} parent=27 // pred_fallthru
          _
      $region28: #{tpu_custom_call.1} parent=5 // pred_fallthru
        _
      %p290 = scmp.le.s32.totalorder 2, %s17
      // Predicated region
      $region41: #{tpu_custom_call.1} parent=5 // pred_check
        %p291 = pneg %p290
      $region42: #{tpu_custom_call.1} parent=5 // pred_check_branch
        %293 = sbr.rel (%p291) target = $region44
      $region43: #{tpu_custom_call.1} parent=5 // pred_region
        %s294 = ssub.s32 %s17, 2
        // Predicated region
        $region45: #{tpu_custom_call.1} parent=43 // pred_check
          %p295 = pneg %p98
        $region46: #{tpu_custom_call.1} parent=43 // pred_check_branch
          %297 = sbr.rel (%p295) target = $region48
        $region47: #{tpu_custom_call.1} parent=43 // pred_region
          %s298 = sand.u32 %s83, 1
          %s299 = scalar_lea.sflag [#allocation4], %s298
          %s300 = sand.u32 %s83, 1
          %s301 = smul.addr %s300, 128
          %s302 = scalar_lea.vmem [#allocation7], %s301
          %303 = dma.done %s299, 2048
        $region48: #{tpu_custom_call.1} parent=43 // pred_fallthru
          _
      $region44: #{tpu_custom_call.1} parent=5 // pred_fallthru
        _
    $region6: #{tpu_custom_call.1} parent=1 // loop_footer
      %s21 = sadd.s32 1, %s17
    $region7: #{tpu_custom_call.1} parent=1 // loop_footer_branch
      %16 = sbr.rel target = $region3
    $region8: #{tpu_custom_call.1} parent=1 // loop_exit
      _
    %304 = vsyncpa [#allocation3], 1
    %s305 = scalar_lea.sflag [#allocation3], 1
    %306 = vsyncpa %s305, 1
    %307 = vsyncpa [#allocation6], 1
    %s308 = scalar_lea.sflag [#allocation6], 1
    %309 = vsyncpa %s308, 1
    %310 = vsyncpa [#allocation4], 1
    %s311 = scalar_lea.sflag [#allocation4], 1
    %312 = vsyncpa %s311, 1

</llo_original>
